<compile_context>
chip_gen: v7x
topology: tpu7x:2x2x1
jax: 0.10.0
libtpu: 0.0.40
codegen_flags: <defaults>
</compile_context>

<pallas_src>
import functools

import jax
import jax.numpy as jnp
from jax.experimental import pallas as pl
from jax.experimental.pallas import tpu as pltpu

NHIDDEN = 128            # fixed by the PyTorch module
BN_EPS = 1e-5
LANES = 128
SUBLANES = 8
_FALLBACK_VMEM = 64 * 1024 * 1024   # v7x per-core physical VMEM (most conservative)


def _round_up(n, m):
    return ((n + m - 1) // m) * m


@functools.lru_cache(maxsize=1)
def _vmem_capacity_bytes():
    try:
        return int(pltpu.get_tpu_info().vmem_capacity_bytes)
    except Exception:
        return _FALLBACK_VMEM


# ---------------------------------------------------------------------------
# Kernels
# ---------------------------------------------------------------------------
def _auxfc_two_matmul_kernel(x_ref, w1_ref, w2_ref, b_ref, o_ref):
    """out = (x @ w1_bn) @ w2 + b_eff  (BN folded into w1, b1 folded into b)."""
    x = x_ref[...].astype(w1_ref.dtype)                 # no-op when dtypes match
    h = jnp.dot(x, w1_ref[...], preferred_element_type=jnp.float32)
    # Dropout: identity in eval mode.
    out = jnp.dot(h.astype(w2_ref.dtype), w2_ref[...],
                  preferred_element_type=jnp.float32)
    o_ref[...] = (out + b_ref[...]).astype(o_ref.dtype)


def _auxfc_fused_kernel(x_ref, w_ref, b_ref, o_ref):
    """out = x @ (w1_bn @ w2) + b_eff  (both linears collapsed at wrapper time)."""
    x = x_ref[...].astype(w_ref.dtype)
    out = jnp.dot(x, w_ref[...], preferred_element_type=jnp.float32)
    o_ref[...] = (out + b_ref[...]).astype(o_ref.dtype)


# ---------------------------------------------------------------------------
# Wrapper
# ---------------------------------------------------------------------------
@functools.partial(
    jax.jit, static_argnames=("block_m", "compute_dtype", "out_dtype", "fuse"))
def aux_fc_forward(x, params, block_m=1024, compute_dtype=jnp.bfloat16,
                   out_dtype=jnp.float32, fuse=None):
    """Eval-mode AuxFc forward. x: (B, idim) -> (B, odim) in out_dtype."""
    B, idim = x.shape
    odim = params["w2"].shape[1]

    # ---- Fold eval-mode BatchNorm1d into Linear1, and b1 through Linear2. ----
    scale = params["gamma"] * jax.lax.rsqrt(params["running_var"] + BN_EPS)
    w1 = params["w1"] * scale[None, :]
    b1 = (params["b1"] - params["running_mean"]) * scale + params["beta"]
    w2 = params["w2"]
    b_eff = b1 @ w2 + params["b2"]                       # (odim,)

    if fuse is None:
        # Collapse both linears only when the combined (idim, odim) weight is
        # not larger than streaming the two factor weights.
        fuse = idim * odim <= NHIDDEN * (idim + odim)

    idim_p = _round_up(idim, LANES)
    odim_p = _round_up(odim, LANES)
    pad_idim = idim_p != idim

    in_bytes = jnp.dtype(compute_dtype).itemsize
    out_bytes = jnp.dtype(out_dtype).itemsize
    x_tile_bytes = in_bytes if pad_idim else jnp.dtype(x.dtype).itemsize

    # ---- VMEM budget per generation (v7x: 64 MiB phys -> ~48 MiB limit;
    #      v5e/v6e: 128 MiB phys -> ~96 MiB limit). ----
    vmem_cap = _vmem_capacity_bytes()
    vmem_limit = max(32 * 1024 * 1024,
                     min(int(0.75 * vmem_cap), 96 * 1024 * 1024))
    budget = vmem_limit - 8 * 1024 * 1024     # headroom for Mosaic internal scratch

    # ---- Batch tile: large (amortizes ~0.35 us per-grid-step overhead on this
    #      HBM-bound kernel), capped so the grid has >= 2 steps (v7x: both TCs
    #      get work), shrunk until the footprint fits the budget. ----
    bm = max(SUBLANES, min(_round_up(block_m, SUBLANES), _round_up(B, SUBLANES)))
    if B > SUBLANES:
        bm = min(bm, _round_up(pl.cdiv(B, 2), SUBLANES))

    def footprint(bm_):
        f = 2 * bm_ * idim_p * x_tile_bytes        # x tile (double-buffered)
        f += 2 * bm_ * odim_p * out_bytes          # out tile (double-buffered)
        if fuse:
            f += idim_p * odim_p * in_bytes        # fused weight (single-buffered)
        else:
            f += (idim_p + odim_p) * NHIDDEN * in_bytes  # w1, w2 (single-buffered)
            f += bm_ * NHIDDEN * 4                       # f32 hidden intermediate
        f += odim_p * 4                            # bias
        return f

    while bm > SUBLANES and footprint(bm) > budget:
        bm = max(SUBLANES, _round_up(bm // 2, SUBLANES))

    grid = (pl.cdiv(B, bm),)                       # ragged last block is fine

    # ---- Operand prep: lane-pad feature dims only when needed (zero padding,
    #      exact). The batch dim is never padded. x stays in its own dtype when
    #      already lane-aligned and is cast per-tile inside the kernel. ----
    if pad_idim:
        x_in = jnp.pad(x.astype(compute_dtype), ((0, 0), (0, idim_p - idim)))
    else:
        x_in = x
    b_p = jnp.pad(b_eff.astype(jnp.float32), (0, odim_p - odim)).reshape(1, odim_p)

    x_spec = pl.BlockSpec((bm, idim_p), lambda i: (i, 0))
    out_spec = pl.BlockSpec((bm, odim_p), lambda i: (i, 0))
    rep = lambda i: (0, 0)
    single = pl.Buffered(1)        # loop-invariant params: one buffer, one DMA

    if fuse:
        w_p = jnp.pad((w1 @ w2).astype(compute_dtype),
                      ((0, idim_p - idim), (0, odim_p - odim)))
        kernel = _auxfc_fused_kernel
        operands = (x_in, w_p, b_p)
        in_specs = [
            x_spec,
            pl.BlockSpec((idim_p, odim_p), rep, pipeline_mode=single),
            pl.BlockSpec((1, odim_p), rep, pipeline_mode=single),
        ]
    else:
        w1_p = jnp.pad(w1.astype(compute_dtype), ((0, idim_p - idim), (0, 0)))
        w2_p = jnp.pad(w2.astype(compute_dtype), ((0, 0), (0, odim_p - odim)))
        kernel = _auxfc_two_matmul_kernel
        operands = (x_in, w1_p, w2_p, b_p)
        in_specs = [
            x_spec,
            pl.BlockSpec((idim_p, NHIDDEN), rep, pipeline_mode=single),
            pl.BlockSpec((NHIDDEN, odim_p), rep, pipeline_mode=single),
            pl.BlockSpec((1, odim_p), rep, pipeline_mode=single),
        ]

    out_p = pl.pallas_call(
        kernel,
        out_shape=jax.ShapeDtypeStruct((B, odim_p), out_dtype),
        grid_spec=pltpu.PrefetchScalarGridSpec(
            num_scalar_prefetch=0,
            grid=grid,
            in_specs=in_specs,
            out_specs=out_spec,
        ),
        compiler_params=pltpu.CompilerParams(
            dimension_semantics=("parallel",),
            vmem_limit_bytes=int(vmem_limit),
        ),
    )(*operands)

    # Strip lane padding only when it was added (no batch slice ever needed).
    return out_p if odim_p == odim else out_p[:, :odim]


# ---------------------------------------------------------------------------
# Demo / correctness check
# ---------------------------------------------------------------------------
def init_aux_fc_params(key, idim, odim):
    """Deterministic parameter init mirroring the PyTorch module's shapes."""
    k1, k2, k3, k4, k5, k6, k7, k8 = jax.random.split(key, 8)
    bound1 = 1.0 / jnp.sqrt(idim)
    bound2 = 1.0 / jnp.sqrt(NHIDDEN)
    return {
        # Stored as (in, out) == transpose of PyTorch's (out, in) weight.
        "w1": jax.random.uniform(k1, (idim, NHIDDEN), jnp.float32, -bound1, bound1),
        "b1": jax.random.uniform(k2, (NHIDDEN,), jnp.float32, -bound1, bound1),
        "gamma": jax.random.uniform(k3, (NHIDDEN,), jnp.float32, 0.5, 1.5),
        "beta": 0.1 * jax.random.normal(k4, (NHIDDEN,), jnp.float32),
        "running_mean": 0.1 * jax.random.normal(k5, (NHIDDEN,), jnp.float32),
        "running_var": jax.random.uniform(k6, (NHIDDEN,), jnp.float32, 0.5, 1.5),
        "w2": jax.random.uniform(k7, (NHIDDEN, odim), jnp.float32, -bound2, bound2),
        "b2": jax.random.uniform(k8, (odim,), jnp.float32, -bound2, bound2),
    }


def aux_fc_reference(x, params):
    """Pure-JAX reference with PyTorch eval-mode op ordering."""
    h = x @ params["w1"] + params["b1"]
    h = ((h - params["running_mean"])
         * jax.lax.rsqrt(params["running_var"] + BN_EPS)
         * params["gamma"] + params["beta"])
    # Dropout: identity in eval mode.
    return h @ params["w2"] + params["b2"]


if __name__ == "__main__":
    key = jax.random.PRNGKey(0)
    kp, kx = jax.random.split(key)

    B, idim, odim = 10, 32, 16          # B deliberately not a multiple of 8
    params = init_aux_fc_params(kp, idim, odim)
    x = jax.random.normal(kx, (B, idim), jnp.float32)

    ref = aux_fc_reference(x, params)

    # Tolerances account for (a) bf16 operands and (b) the BN/bias folds
    # reassociating FP ops while TPU matmuls may use bf16-precision inputs by
    # default; the fold-matched f32 check below is the tight structural check.

    # 1) Performance defaults: bf16 operands, fused single-matmul path.
    out = jax.block_until_ready(aux_fc_forward(x, params))
    assert out.shape == (B, odim) and out.dtype == jnp.float32
    assert jnp.allclose(out, ref, atol=5e-2, rtol=5e-2), "bf16 fused mismatch"

    # 2) f32 operands, two-matmul path, multi-step ragged grid (block_m=8).
    out_f32 = jax.block_until_ready(
        aux_fc_forward(x, params, compute_dtype=jnp.float32, fuse=False,
                       block_m=8))
    assert jnp.allclose(out_f32, ref, atol=1e-2, rtol=1e-2), "f32 mismatch"
    # Tight check against a fold-matched pure-JAX reference (same op structure).
    scale = params["gamma"] * jax.lax.rsqrt(params["running_var"] + BN_EPS)
    w1f = params["w1"] * scale[None, :]
    b1f = (params["b1"] - params["running_mean"]) * scale + params["beta"]
    ref_folded = (x @ w1f) @ params["w2"] + (b1f @ params["w2"] + params["b2"])
    assert jnp.allclose(out_f32, ref_folded, atol=2e-3, rtol=2e-3), \
        "f32 fold-matched mismatch"

    # 3) f32 operands, fused single-matmul path.
    out_f32_fused = jax.block_until_ready(
        aux_fc_forward(x, params, compute_dtype=jnp.float32, fuse=True))
    assert jnp.allclose(out_f32_fused, ref, atol=2e-2, rtol=2e-2), \
        "f32 fused mismatch"

    print("KERNEL_OK")
</pallas_src>

<mosaic_0001>
module attributes {stable_mosaic.version = 11 : i64} {
  func.func @_auxfc_fused_kernel(%arg0: i32, %arg1: memref<8x128xbf16, #tpu.memory_space<vmem>>, %arg2: memref<128x128xbf16, #tpu.memory_space<vmem>>, %arg3: memref<1x128xf32, #tpu.memory_space<vmem>>, %arg4: memref<8x128xf32, #tpu.memory_space<vmem>>) attributes {dimension_semantics = [#tpu.dimension_semantics<parallel>], iteration_bounds = array<i64: 2>, scalar_prefetch = 0 : i64, scratch_operands = 0 : i64, tpu.core_type = #tpu.core_type<tc>, window_params = [{transform_indices = @transform_0, window_bounds = array<i64: 8, 128>}, {pipeline_mode = #tpu.pipeline_mode<synchronous>, transform_indices = @transform_1, window_bounds = array<i64: 128, 128>}, {pipeline_mode = #tpu.pipeline_mode<synchronous>, transform_indices = @transform_2, window_bounds = array<i64: 1, 128>}, {transform_indices = @transform_3, window_bounds = array<i64: 8, 128>}]} {
    %c0 = arith.constant 0 : index
    %c0_0 = arith.constant 0 : index
    %0 = vector.load %arg1[%c0, %c0_0] : memref<8x128xbf16, #tpu.memory_space<vmem>>, vector<8x128xbf16>
    %c0_1 = arith.constant 0 : index
    %c0_2 = arith.constant 0 : index
    %1 = vector.load %arg2[%c0_1, %c0_2] : memref<128x128xbf16, #tpu.memory_space<vmem>>, vector<128x128xbf16>
    %cst = arith.constant dense<0.000000e+00> : vector<8x128xf32>
    %2 = tpu.matmul %0, %1, %cst {dimension_numbers = #tpu.dot_dimension_numbers<[1], [0], [0], [1], [0, 0, 1, 1], [], []>} : vector<8x128xbf16>, vector<128x128xbf16>, vector<8x128xf32> -> vector<8x128xf32>
    %c0_3 = arith.constant 0 : index
    %c0_4 = arith.constant 0 : index
    %3 = vector.load %arg3[%c0_3, %c0_4] : memref<1x128xf32, #tpu.memory_space<vmem>>, vector<1x128xf32>
    %4 = vector.broadcast %3 : vector<1x128xf32> to vector<8x128xf32>
    %5 = arith.addf %2, %4 : vector<8x128xf32>
    %c0_5 = arith.constant 0 : index
    %c0_6 = arith.constant 0 : index
    %6 = vector.load %arg4[%c0_5, %c0_6] : memref<8x128xf32, #tpu.memory_space<vmem>>, vector<8x128xf32>
    tpu.vector_store %arg4[%c0_5, %c0_6], %5 {strides = array<i32>} : memref<8x128xf32, #tpu.memory_space<vmem>>, vector<8x128xf32>,
    return
  }
  func.func @transform_0(%arg0: i32) -> (i32, i32) {
    %c0_i32 = arith.constant 0 : i32
    %c0_i32_0 = arith.constant 0 : i32
    return %arg0, %c0_i32 : i32, i32
  }
  func.func @transform_1(%arg0: i32) -> (i32, i32) {
    %c0_i32 = arith.constant 0 : i32
    %c0_i32_0 = arith.constant 0 : i32
    %c0_i32_1 = arith.constant 0 : i32
    return %c0_i32, %c0_i32_0 : i32, i32
  }
  func.func @transform_2(%arg0: i32) -> (i32, i32) {
    %c0_i32 = arith.constant 0 : i32
    %c0_i32_0 = arith.constant 0 : i32
    %c0_i32_1 = arith.constant 0 : i32
    return %c0_i32, %c0_i32_0 : i32, i32
  }
  func.func @transform_3(%arg0: i32) -> (i32, i32) {
    %c0_i32 = arith.constant 0 : i32
    %c0_i32_0 = arith.constant 0 : i32
    return %arg0, %c0_i32 : i32, i32
  }
}

</mosaic_0001>

<llo_original>
// kernel: aux_fc_forward.1
$region0: #{aux_fc_forward.1}
  #allocation0 [shape = 'u32[]', space=smem, size = 0x4, offset = 0x4, fixed_abs, tag = 'smem constant byte address 0x4 - core index']
  #allocation1 [shape = 'u32[144,128]{1,0:T(1,128)}', space=vmem, size = 0x12000, scoped, tag = 'internal scratch']
  %s0 = inlined_call_operand.vmem [shape: bf16[10,128], index: 0, kind: input, shape index: {}]
  %s1 = inlined_call_operand.vmem [shape: bf16[128,128], index: 1, kind: input, shape index: {}]
  %s2 = inlined_call_operand.vmem [shape: f32[1,128], index: 2, kind: input, shape index: {}]
  %s3 = inlined_call_operand.hbm [shape: f32[10,128], index: 3, kind: output, shape index: {}]
  %s4 = sld [smem:[#allocation0]]
  $region45: #{aux_fc_forward.1} parent=0
    _
  %s6 = ssub.s32 1, %s4
  %s7 = scalar_select 0, %s6, %s4
  $region1: #{aux_fc_forward.1} parent=0
    #allocation2 [shape = 'u8[8192]{0}', space=vmem, size = 0x2000, scoped, tag = 'output window, operand 0']
    #allocation3 [shape = 's32[2]{0}', space=sflag, size = 0x8, scoped, tag = 'scoped memory for aux_fc_forward.1']
    %8 = vsyncpa [#allocation3], 0
    %s9 = scalar_lea.sflag [#allocation3], 1
    %10 = vsyncpa %s9, 0
    loop: start=0, step=1, limit=4
    $region2: #{aux_fc_forward.1} parent=1 // loop_pre_header
      _
    $region3: #{aux_fc_forward.1} parent=1 // loop_header
      %s12 = sphi 0, %s16
      %p13 = scmp.ge.s32.totalorder %s12, 4
      %s22 = sphi 0, %s24
      %s25 = sphi 0, %s22
      %s26 = sphi 0, %s25
      %s42 = sphi 0, %s26
      %s46 = sphi 0, %s46
      %s48 = sphi 0, %s46
      %s49 = sphi 0, %s48
      %s63 = sphi 0, %s49
      %s67 = sphi 0, %s67
      %s69 = sphi 0, %s67
      %s70 = sphi 0, %s69
      %s84 = sphi 0, %s70
      %s90 = sphi 0, %s92
      %s93 = sphi 0, %s90
      %s94 = sphi 0, %s93
      %s110 = sphi 0, %s94
    $region4: #{aux_fc_forward.1} parent=1 // loop_header_branch
      %15 = sbr.rel (%p13) target = $region8
    $region5: #{aux_fc_forward.1} parent=1 // loop_body
      %s17 = ssub.s32 %s12, 1
      %s18 = ssub.s32 %s12, 2
      %s19 = sadd.s32 %s12, 1
      %s20 = ssub.s32 %s12, %s19
      %p21 = scmp.eq.s32.totalorder %s20, 0
      %s23 = sadd.s32 %s22, 1
      %s24 = scalar_select %p21, %s22, %s23
      %p27 = pneg %p21
      %p28 = scmp.eq.s32.totalorder %s12, 1
      %p29 = por %p27, %p28
      %p30 = scmp.ne.s32.totalorder %s22, %s25
      %p31 = scmp.eq.s32.totalorder %s12, 0
      %p32 = por %p30, %p31
      %p33 = scmp.ne.s32.totalorder %s22, %s25
      %p34 = scmp.eq.s32.totalorder %s17, 1
      %p35 = por %p33, %p34
      %p36 = scmp.ne.s32.totalorder %s25, %s26
      %p37 = scmp.eq.s32.totalorder %s17, 0
      %p38 = por %p36, %p37
      %p39 = scmp.ne.s32.totalorder %s25, %s26
      %p40 = scmp.eq.s32.totalorder %s18, 1
      %p41 = por %p39, %p40
      %p43 = scmp.ne.s32.totalorder %s26, %s42
      %p44 = scmp.eq.s32.totalorder %s18, 0
      %p45 = por %p43, %p44
      %s47 = sadd.s32 %s46, 1
      %p50 = scmp.eq.s32.totalorder %s12, 1
      %p51 = scmp.ne.s32.totalorder %s46, %s48
      %p52 = scmp.eq.s32.totalorder %s12, 0
      %p53 = por %p51, %p52
      %p54 = scmp.ne.s32.totalorder %s46, %s48
      %p55 = scmp.eq.s32.totalorder %s17, 1
      %p56 = por %p54, %p55
      %p57 = scmp.ne.s32.totalorder %s48, %s49
      %p58 = scmp.eq.s32.totalorder %s17, 0
      %p59 = por %p57, %p58
      %p60 = scmp.ne.s32.totalorder %s48, %s49
      %p61 = scmp.eq.s32.totalorder %s18, 1
      %p62 = por %p60, %p61
      %p64 = scmp.ne.s32.totalorder %s49, %s63
      %p65 = scmp.eq.s32.totalorder %s18, 0
      %p66 = por %p64, %p65
      %s68 = sadd.s32 %s67, 1
      %p71 = scmp.eq.s32.totalorder %s12, 1
      %p72 = scmp.ne.s32.totalorder %s67, %s69
      %p73 = scmp.eq.s32.totalorder %s12, 0
      %p74 = por %p72, %p73
      %p75 = scmp.ne.s32.totalorder %s67, %s69
      %p76 = scmp.eq.s32.totalorder %s17, 1
      %p77 = por %p75, %p76
      %p78 = scmp.ne.s32.totalorder %s69, %s70
      %p79 = scmp.eq.s32.totalorder %s17, 0
      %p80 = por %p78, %p79
      %p81 = scmp.ne.s32.totalorder %s69, %s70
      %p82 = scmp.eq.s32.totalorder %s18, 1
      %p83 = por %p81, %p82
      %p85 = scmp.ne.s32.totalorder %s70, %s84
      %p86 = scmp.eq.s32.totalorder %s18, 0
      %p87 = por %p85, %p86
      %s88 = ssub.s32 %s12, %s19
      %p89 = scmp.eq.s32.totalorder %s88, 0
      %s91 = sadd.s32 %s90, 1
      %s92 = scalar_select %p89, %s90, %s91
      %p95 = pneg %p89
      %p96 = scmp.eq.s32.totalorder %s12, 1
      %p97 = por %p95, %p96
      %p98 = scmp.ne.s32.totalorder %s90, %s93
      %p99 = scmp.eq.s32.totalorder %s12, 0
      %p100 = por %p98, %p99
      %p101 = scmp.ne.s32.totalorder %s90, %s93
      %p102 = scmp.eq.s32.totalorder %s17, 1
      %p103 = por %p101, %p102
      %p104 = scmp.ne.s32.totalorder %s93, %s94
      %p105 = scmp.eq.s32.totalorder %s17, 0
      %p106 = por %p104, %p105
      %p107 = scmp.ne.s32.totalorder %s93, %s94
      %p108 = scmp.eq.s32.totalorder %s18, 1
      %p109 = por %p107, %p108
      %p111 = scmp.ne.s32.totalorder %s94, %s110
      %p112 = scmp.eq.s32.totalorder %s18, 0
      %p113 = por %p111, %p112
      %p114 = scmp.le.s32.totalorder 1, %s12
      %p115 = scmp.lt.s32.totalorder %s12, 3
      %p116 = pnand %p114, %p115
      %p117 = pneg %p116
      // Predicated region
      $region9: #{aux_fc_forward.1} parent=5 // pred_check
        _
      $region10: #{aux_fc_forward.1} parent=5 // pred_check_branch
        %119 = sbr.rel (%p116) target = $region12
      $region11: #{aux_fc_forward.1} parent=5 // pred_region
        %s120 = ssub.s32 %s12, 1
        // Predicated region
        $region13: #{aux_fc_forward.1} parent=11 // pred_check
          %p121 = pneg %p59
        $region14: #{aux_fc_forward.1} parent=11 // pred_check_branch
          %123 = sbr.rel (%p121) target = $region16
        $region15: #{aux_fc_forward.1} parent=11 // pred_region
          _
        $region16: #{aux_fc_forward.1} parent=11 // pred_fallthru
          _
        // Predicated region
        $region17: #{aux_fc_forward.1} parent=11 // pred_check
          %p124 = pneg %p80
        $region18: #{aux_fc_forward.1} parent=11 // pred_check_branch
          %126 = sbr.rel (%p124) target = $region20
        $region19: #{aux_fc_forward.1} parent=11 // pred_region
          _
        $region20: #{aux_fc_forward.1} parent=11 // pred_fallthru
          _
      $region12: #{aux_fc_forward.1} parent=5 // pred_fallthru
        _
      %p127 = scmp.lt.s32.totalorder %s12, 2
      // Predicated region
      $region21: #{aux_fc_forward.1} parent=5 // pred_check
        %p128 = pneg %p127
      $region22: #{aux_fc_forward.1} parent=5 // pred_check_branch
        %130 = sbr.rel (%p128) target = $region24
      $region23: #{aux_fc_forward.1} parent=5 // pred_region
        // Predicated region
        $region25: #{aux_fc_forward.1} parent=23 // pred_check
          %p131 = pneg %p32
        $region26: #{aux_fc_forward.1} parent=23 // pred_check_branch
          %133 = sbr.rel (%p131) target = $region28
        $region27: #{aux_fc_forward.1} parent=23 // pred_region
          %p134 = scmp.lt.s32.totalorder %s12, 1
          %s135 = scalar_select %p134, %s12, 1
          %s136 = smul.addr %s135, 4
          %s137 = scalar_lea.vmem %s0, %s136
        $region28: #{aux_fc_forward.1} parent=23 // pred_fallthru
          _
      $region24: #{aux_fc_forward.1} parent=5 // pred_fallthru
        _
      %p138 = scmp.le.s32.totalorder 1, %s12
      %p139 = scmp.lt.s32.totalorder %s12, 3
      %p140 = pnand %p138, %p139
      %p141 = pneg %p140
      // Predicated region
      $region29: #{aux_fc_forward.1} parent=5 // pred_check
        _
      $region30: #{aux_fc_forward.1} parent=5 // pred_check_branch
        %143 = sbr.rel (%p140) target = $region32
      $region31: #{aux_fc_forward.1} parent=5 // pred_region
        %s144 = ssub.s32 %s12, 1
        %p145 = scmp.lt.s32.totalorder %s17, 1
        %s146 = scalar_select %p145, %s17, 1
        %s147 = smul.addr %s146, 4
        %s148 = scalar_lea.vmem %s0, %s147
        %p149 = pneg %p38
        %p150 = pneg %p35
        %p151 = pneg %p59
        %p152 = pneg %p56
        %p153 = pneg %p80
        %p154 = pneg %p77
        %p155 = pneg %p106
        %p156 = pneg %p103
        %s157 = sand.u32 %s93, 1
        %s158 = scalar_lea.sflag [#allocation3], %s157
        %s159 = sand.u32 %s93, 1
        %s160 = smul.addr %s159, 8
        %s161 = scalar_lea.vmem [#allocation2], %s160
        %p162 = scmp.lt.s32.totalorder %s17, 1
        %s163 = scalar_select %p162, %s17, 1
        %s164 = smul.addr %s163, 4
        %s165 = scalar_lea.vmem %s0, %s164
        %v167 = vld [vmem:[%s165] sm:$0xf]
        %v168 = vld [vmem:[%s1] sm:$0xf]
        %v169 = vld [vmem:[%s1 + $0x4] sm:$0xf]
        %v170 = vld [vmem:[%s1 + $0x8] sm:$0xf]
        %v171 = vld [vmem:[%s1 + $0xc] sm:$0xf]
        %v172 = vld [vmem:[%s1 + $0x10] sm:$0xf]
        %v173 = vld [vmem:[%s1 + $0x14] sm:$0xf]
        %v174 = vld [vmem:[%s1 + $0x18] sm:$0xf]
        %v175 = vld [vmem:[%s1 + $0x1c] sm:$0xf]
        %v176 = vld [vmem:[%s1 + $0x20] sm:$0xf]
        %v177 = vld [vmem:[%s1 + $0x24] sm:$0xf]
        %v178 = vld [vmem:[%s1 + $0x28] sm:$0xf]
        %v179 = vld [vmem:[%s1 + $0x2c] sm:$0xf]
        %v180 = vld [vmem:[%s1 + $0x30] sm:$0xf]
        %v181 = vld [vmem:[%s1 + $0x34] sm:$0xf]
        %v182 = vld [vmem:[%s1 + $0x38] sm:$0xf]
        %v183 = vld [vmem:[%s1 + $0x3c] sm:$0xf]
        %v184 = vld [vmem:[%s2] sm:$0x1]
        %v186 = vlaneseq
        %v187 = vshrl.u32 %v186, 7
        %v188 = vsub.s32 0, %v187
        %v189 = vrot.slane %v184, %v188
        %v207 = vunpack.c.l.b16 %v168
        %v208 = vunpack.c.l.b16 %v169
        %v209 = vunpack.c.l.b16 %v170
        %v210 = vunpack.c.l.b16 %v171
        %v211 = vunpack.c.l.b16 %v172
        %v212 = vunpack.c.l.b16 %v173
        %v213 = vunpack.c.l.b16 %v174
        %v214 = vunpack.c.l.b16 %v175
        %v215 = vunpack.c.l.b16 %v176
        %v216 = vunpack.c.l.b16 %v177
        %v217 = vunpack.c.l.b16 %v178
        %v218 = vunpack.c.l.b16 %v179
        %v219 = vunpack.c.l.b16 %v180
        %v220 = vunpack.c.l.b16 %v181
        %v221 = vunpack.c.l.b16 %v182
        %v222 = vunpack.c.l.b16 %v183
        %v223 = vpack.c.b16 %v208, %v207
        %v224 = vpack.c.b16 %v210, %v209
        %v225 = vpack.c.b16 %v212, %v211
        %v226 = vpack.c.b16 %v214, %v213
        %v227 = vpack.c.b16 %v216, %v215
        %v228 = vpack.c.b16 %v218, %v217
        %v229 = vpack.c.b16 %v220, %v219
        %v230 = vpack.c.b16 %v222, %v221
        %239 = vmatprep.subr.bf16.mxu0 0
        %240 = vmatpush1.bf16.msra.mxu0 %v223
        %241 = vmatprep.subr.bf16.mxu0 0
        %242 = vmatpush1.bf16.msra.mxu0 %v224
        %243 = vmatprep.subr.bf16.mxu0 0
        %244 = vmatpush1.bf16.msra.mxu0 %v225
        %245 = vmatprep.subr.bf16.mxu0 0
        %246 = vmatpush1.bf16.msra.mxu0 %v226
        %247 = vmatprep.subr.bf16.mxu0 0
        %248 = vmatpush1.bf16.msra.mxu0 %v227
        %249 = vmatprep.subr.bf16.mxu0 0
        %250 = vmatpush1.bf16.msra.mxu0 %v228
        %251 = vmatprep.subr.bf16.mxu0 0
        %252 = vmatpush1.bf16.msra.mxu0 %v229
        %253 = vmatprep.subr.bf16.mxu0 0
        %254 = vmatpush1.bf16.msra.mxu0 %v230
        %255 = vmatprep.subr.bf16.mxu0 0
        %256 = vmatpush1.bf16.msra.mxu0 0
        %257 = vmatprep.subr.bf16.mxu0 0
        %258 = vmatpush1.bf16.msra.mxu0 0
        %259 = vmatprep.subr.bf16.mxu0 0
        %260 = vmatpush1.bf16.msra.mxu0 0
        %261 = vmatprep.subr.bf16.mxu0 0
        %262 = vmatpush1.bf16.msra.mxu0 0
        %263 = vmatprep.subr.bf16.mxu0 0
        %264 = vmatpush1.bf16.msra.mxu0 0
        %265 = vmatprep.subr.bf16.mxu0 0
        %266 = vmatpush1.bf16.msra.mxu0 0
        %267 = vmatprep.subr.bf16.mxu0 0
        %268 = vmatpush1.bf16.msra.mxu0 0
        %269 = vmatprep.subr.bf16.mxu0 0
        %270 = vmatpush1.bf16.msra.mxu0 0
        %271 = vmatprep.mubr.bf16.mxu0 0
        %272 = vmatmul.mubr.bf16.gmra.mrb[0].mxu0 %v167
        %v273 = vpop.f32.mrb[0].mxu0
        %v274 = vadd.f32 %v189, %v273
        %v275 = vpop.f32.mrb[0].mxu0
        %v276 = vpop.f32.mrb[0].mxu0
        %v277 = vpop.f32.mrb[0].mxu0
        %278 = vdwg.mxu0
        %279 = vst [vmem:[%s161] sm:$0xff] %v274
        %s280 = sand.u32 %s93, 1
        %s281 = scalar_lea.sflag [#allocation3], %s280
        %s282 = sand.u32 %s93, 1
        %s283 = smul.addr %s282, 8
        %s284 = scalar_lea.vmem [#allocation2], %s283
        // Predicated region
        $region33: #{aux_fc_forward.1} parent=31 // pred_check
          %p285 = pneg %p103
        $region34: #{aux_fc_forward.1} parent=31 // pred_check_branch
          %287 = sbr.rel (%p285) target = $region36
        $region35: #{aux_fc_forward.1} parent=31 // pred_region
          %s289 = ssub.s32 128, 128
          %290 = vsyncadd %s281, %s289
          %s291 = smul.addr %s17, 128
          %s292 = scalar_lea.hbm %s3, %s291
          %s294 = sshll.u32 %s284, 4
          %s295 = int_to_ptr.vmem [resolvable:$true] %s294
          %297 = dma.vmem_to_hbm [thread:$0]  %s295, 128, %s292, %s281
        $region36: #{aux_fc_forward.1} parent=31 // pred_fallthru
          _
      $region32: #{aux_fc_forward.1} parent=5 // pred_fallthru
        _
      %p298 = scmp.le.s32.totalorder 2, %s12
      // Predicated region
      $region37: #{aux_fc_forward.1} parent=5 // pred_check
        %p299 = pneg %p298
      $region38: #{aux_fc_forward.1} parent=5 // pred_check_branch
        %301 = sbr.rel (%p299) target = $region40
      $region39: #{aux_fc_forward.1} parent=5 // pred_region
        %s302 = ssub.s32 %s12, 2
        // Predicated region
        $region41: #{aux_fc_forward.1} parent=39 // pred_check
          %p303 = pneg %p109
        $region42: #{aux_fc_forward.1} parent=39 // pred_check_branch
          %305 = sbr.rel (%p303) target = $region44
        $region43: #{aux_fc_forward.1} parent=39 // pred_region
          %s306 = sand.u32 %s94, 1
          %s307 = scalar_lea.sflag [#allocation3], %s306
          %s308 = sand.u32 %s94, 1
          %s309 = smul.addr %s308, 8
          %s310 = scalar_lea.vmem [#allocation2], %s309
          %311 = dma.done %s307, 128
        $region44: #{aux_fc_forward.1} parent=39 // pred_fallthru
          _
      $region40: #{aux_fc_forward.1} parent=5 // pred_fallthru
        _
    $region6: #{aux_fc_forward.1} parent=1 // loop_footer
      %s16 = sadd.s32 1, %s12
    $region7: #{aux_fc_forward.1} parent=1 // loop_footer_branch
      %11 = sbr.rel target = $region3
    $region8: #{aux_fc_forward.1} parent=1 // loop_exit
      _
    %312 = vsyncpa [#allocation3], 1
    %s313 = scalar_lea.sflag [#allocation3], 1
    %314 = vsyncpa %s313, 1

</llo_original>
